<compile_context>
chip_gen: v7x
topology: tpu7x:2x2x1
jax: 0.10.0
libtpu: 0.0.40
codegen_flags: <defaults>
</compile_context>

<pallas_src>
import functools

import jax
import jax.numpy as jnp
from jax.experimental import pallas as pl
from jax.experimental.pallas import tpu as pltpu


def _round_up(x, m):
    return (x + m - 1) // m * m


def _stacked_lstm_kernel(x_ref, h0_ref, c0_ref, w_ref, b_ref,
                         h1_ref, c1_ref, xh_ref, *, hidden_size, x_width):
    """One grid step == one LSTM layer. xh_ref (VMEM scratch) carries the layer input."""
    H = hidden_size
    layer = pl.program_id(0)

    # Layer 0: seed the x-part of the concat buffer with the (padded, bf16) input.
    @pl.when(layer == 0)
    def _():
        xh_ref[:, :x_width] = x_ref[...]

    # Current layer's h_0 goes into the trailing H lanes of the concat buffer.
    xh_ref[:, x_width:] = h0_ref[0].astype(xh_ref.dtype)

    # gates: (B, 4H) = [x ; h] @ [W_ih^T ; W_hh^T]  — single bf16 MXU matmul, f32 accum.
    # Weight rows in the x-slot beyond this layer's true input width are zero, so any
    # stale lanes in xh_ref contribute exactly 0.
    gates = jnp.dot(xh_ref[...], w_ref[0],
                    preferred_element_type=jnp.float32) + b_ref[0]

    i_g = jax.nn.sigmoid(gates[:, 0 * H:1 * H])
    f_g = jax.nn.sigmoid(gates[:, 1 * H:2 * H])
    g_g = jnp.tanh(gates[:, 2 * H:3 * H])
    o_g = jax.nn.sigmoid(gates[:, 3 * H:4 * H])

    c_new = f_g * c0_ref[0] + i_g * g_g
    h_new = o_g * jnp.tanh(c_new)

    h1_ref[0] = h_new.astype(h1_ref.dtype)
    c1_ref[0] = c_new.astype(c1_ref.dtype)

    # Dropout is identity in eval mode: feed h straight into the next layer's x slot.
    @pl.when(layer < pl.num_programs(0) - 1)
    def _():
        xh_ref[:, :H] = h_new.astype(xh_ref.dtype)


def init_raw_params(key, num_layers, input_size, rnn_size, dtype=jnp.float32):
    """PyTorch-style LSTMCell init: U(-1/sqrt(H), 1/sqrt(H))."""
    params = []
    bound = 1.0 / (rnn_size ** 0.5)
    in_sz = input_size
    for _ in range(num_layers):
        key, k1, k2, k3, k4 = jax.random.split(key, 5)
        params.append({
            "w_ih": jax.random.uniform(k1, (4 * rnn_size, in_sz), dtype, -bound, bound),
            "w_hh": jax.random.uniform(k2, (4 * rnn_size, rnn_size), dtype, -bound, bound),
            "b_ih": jax.random.uniform(k3, (4 * rnn_size,), dtype, -bound, bound),
            "b_hh": jax.random.uniform(k4, (4 * rnn_size,), dtype, -bound, bound),
        })
        in_sz = rnn_size
    return params


def pack_params(layer_params, input_size, rnn_size, weight_dtype=jnp.bfloat16):
    """Stack per-layer PyTorch-style weights into fused, MXU-friendly arrays.

    Returns:
      w : (L, x_width + H, 4H) weight_dtype.  Rows [0:in_sz] = W_ih^T,
          rows [x_width:] = W_hh^T, zeros elsewhere (inert padding).
      b : (L, 1, 4H) f32 (= b_ih + b_hh)
      x_width : lane-aligned width reserved for the layer input (static int)
    """
    H = rnn_size
    x_width = _round_up(max(input_size, H), 128)
    ws, bs = [], []
    for li, p in enumerate(layer_params):
        in_sz = input_size if li == 0 else H
        w_cat = jnp.zeros((x_width + H, 4 * H), jnp.float32)
        w_cat = w_cat.at[:in_sz, :].set(p["w_ih"].T.astype(jnp.float32))
        w_cat = w_cat.at[x_width:, :].set(p["w_hh"].T.astype(jnp.float32))
        ws.append(w_cat)
        bs.append((p["b_ih"] + p["b_hh"]).reshape(1, 4 * H).astype(jnp.float32))
    return {"w": jnp.stack(ws).astype(weight_dtype),
            "b": jnp.stack(bs),
            "x_width": x_width}


def stacked_lstm_forward(inputs, hidden, packed, *, compute_dtype=jnp.bfloat16):
    """Mirror of StackedLSTM.forward (eval mode).

    inputs : (B, input_size)
    hidden : (h_0, c_0), each (num_layers, B, rnn_size)
    packed : output of pack_params
    returns (output, (h_1, c_1)); output == h_1[-1] (dropout is identity in eval).
    """
    h_0, c_0 = hidden
    L, B, H = h_0.shape
    in_sz = inputs.shape[1]
    x_width = packed["x_width"]
    K = x_width + H
    B_pad = _round_up(max(B, 8), 8)

    # Pad batch to the sublane quantum; pad input features into the lane-aligned
    # x slot (matching weight rows are zero, so padding is numerically inert).
    x_p = jnp.zeros((B_pad, x_width), compute_dtype)
    x_p = x_p.at[:B, :in_sz].set(inputs.astype(compute_dtype))
    h0_p = jnp.zeros((L, B_pad, H), jnp.float32).at[:, :B, :].set(h_0.astype(jnp.float32))
    c0_p = jnp.zeros((L, B_pad, H), jnp.float32).at[:, :B, :].set(c_0.astype(jnp.float32))

    w = packed["w"].astype(compute_dtype)
    b = packed["b"]

    cost = pl.CostEstimate(
        flops=2 * L * B_pad * K * 4 * H,
        transcendentals=5 * L * B_pad * H,
        bytes_accessed=(w.size * w.dtype.itemsize
                        + b.size * b.dtype.itemsize
                        + x_p.size * x_p.dtype.itemsize
                        + 4 * L * B_pad * H * 4),
    )

    grid_spec = pltpu.PrefetchScalarGridSpec(
        num_scalar_prefetch=0,
        grid=(L,),
        in_specs=[
            pl.BlockSpec((B_pad, x_width), lambda l: (0, 0)),   # x (used at layer 0)
            pl.BlockSpec((1, B_pad, H), lambda l: (l, 0, 0)),   # h_0[l]
            pl.BlockSpec((1, B_pad, H), lambda l: (l, 0, 0)),   # c_0[l]
            pl.BlockSpec((1, K, 4 * H), lambda l: (l, 0, 0)),   # W_cat^T[l]
            pl.BlockSpec((1, 1, 4 * H), lambda l: (l, 0, 0)),   # bias[l]
        ],
        out_specs=(
            pl.BlockSpec((1, B_pad, H), lambda l: (l, 0, 0)),   # h_1[l]
            pl.BlockSpec((1, B_pad, H), lambda l: (l, 0, 0)),   # c_1[l]
        ),
        scratch_shapes=[pltpu.VMEM((B_pad, K), compute_dtype)],  # [x ; h] concat buffer
    )

    kernel = functools.partial(_stacked_lstm_kernel, hidden_size=H, x_width=x_width)
    h1_p, c1_p = pl.pallas_call(
        kernel,
        out_shape=(jax.ShapeDtypeStruct((L, B_pad, H), jnp.float32),
                   jax.ShapeDtypeStruct((L, B_pad, H), jnp.float32)),
        grid_spec=grid_spec,
        compiler_params=pltpu.CompilerParams(
            dimension_semantics=("arbitrary",)),  # layers carry a sequential dependency
        cost_estimate=cost,
    )(x_p, h0_p, c0_p, w, b)

    h_1 = h1_p[:, :B, :]
    c_1 = c1_p[:, :B, :]
    return h_1[-1], (h_1, c_1)


def _reference_forward(inputs, hidden, packed, input_size):
    """Pure-JAX reference mirroring the kernel's bf16 matmul inputs / f32 accumulation."""
    h_0, c_0 = hidden
    L, _, H = h_0.shape
    x_width = packed["x_width"]
    w = packed["w"].astype(jnp.float32)   # already bf16-truncated
    b = packed["b"]
    x = inputs
    h_1, c_1 = [], []
    for l in range(L):
        in_sz = input_size if l == 0 else H
        xb = x.astype(jnp.bfloat16).astype(jnp.float32)
        hb = h_0[l].astype(jnp.bfloat16).astype(jnp.float32)
        gates = xb @ w[l, :in_sz, :] + hb @ w[l, x_width:, :] + b[l]
        i_g = jax.nn.sigmoid(gates[:, 0 * H:1 * H])
        f_g = jax.nn.sigmoid(gates[:, 1 * H:2 * H])
        g_g = jnp.tanh(gates[:, 2 * H:3 * H])
        o_g = jax.nn.sigmoid(gates[:, 3 * H:4 * H])
        c_l = f_g * c_0[l] + i_g * g_g
        h_l = o_g * jnp.tanh(c_l)
        x = h_l  # dropout identity in eval mode
        h_1.append(h_l)
        c_1.append(c_l)
    return x, (jnp.stack(h_1), jnp.stack(c_1))


if __name__ == "__main__":
    num_layers = 3
    input_size = 128     # lane-dense (multiple of 128)
    rnn_size = 128
    batch = 6            # deliberately not a multiple of 8: exercises batch padding

    key = jax.random.PRNGKey(0)
    key, kx, kh, kc = jax.random.split(key, 4)

    x = jax.random.normal(kx, (batch, input_size), jnp.float32)
    h_0 = jax.random.normal(kh, (num_layers, batch, rnn_size), jnp.float32)
    c_0 = jax.random.normal(kc, (num_layers, batch, rnn_size), jnp.float32)

    raw = init_raw_params(key, num_layers, input_size, rnn_size)
    packed = pack_params(raw, input_size, rnn_size)

    out, (h_1, c_1) = stacked_lstm_forward(x, (h_0, c_0), packed)
    jax.block_until_ready((out, h_1, c_1))

    ref_out, (ref_h, ref_c) = _reference_forward(x, (h_0, c_0), packed, input_size)

    assert out.shape == (batch, rnn_size)
    assert h_1.shape == (num_layers, batch, rnn_size)
    assert c_1.shape == (num_layers, batch, rnn_size)
    assert jnp.allclose(out, ref_out, atol=2e-3, rtol=2e-3)
    assert jnp.allclose(h_1, ref_h, atol=2e-3, rtol=2e-3)
    assert jnp.allclose(c_1, ref_c, atol=2e-3, rtol=2e-3)

    print("KERNEL_OK")
</pallas_src>

<mosaic_0001>
module attributes {stable_mosaic.version = 11 : i64} {
  func.func @_stacked_lstm_kernel(%arg0: i32, %arg1: memref<8x128xbf16, #tpu.memory_space<vmem>>, %arg2: memref<1x8x128xf32, #tpu.memory_space<vmem>>, %arg3: memref<1x8x128xf32, #tpu.memory_space<vmem>>, %arg4: memref<1x256x512xbf16, #tpu.memory_space<vmem>>, %arg5: memref<1x1x512xf32, #tpu.memory_space<vmem>>, %arg6: memref<1x8x128xf32, #tpu.memory_space<vmem>>, %arg7: memref<1x8x128xf32, #tpu.memory_space<vmem>>, %arg8: memref<8x256xbf16, #tpu.memory_space<vmem>>) attributes {dimension_semantics = [#tpu.dimension_semantics<arbitrary>], iteration_bounds = array<i64: 3>, scalar_prefetch = 0 : i64, scratch_operands = 1 : i64, tpu.core_type = #tpu.core_type<tc>, window_params = [{pipeline_mode = #tpu.pipeline_mode<synchronous>, transform_indices = @transform_0, window_bounds = array<i64: 8, 128>}, {transform_indices = @transform_1, window_bounds = array<i64: 1, 8, 128>}, {transform_indices = @transform_2, window_bounds = array<i64: 1, 8, 128>}, {transform_indices = @transform_3, window_bounds = array<i64: 1, 256, 512>}, {transform_indices = @transform_4, window_bounds = array<i64: 1, 1, 512>}, {transform_indices = @transform_5, window_bounds = array<i64: 1, 8, 128>}, {transform_indices = @transform_6, window_bounds = array<i64: 1, 8, 128>}]} {
    %c0_i32 = arith.constant 0 : i32
    %0 = arith.cmpi eq, %arg0, %c0_i32 : i32
    %1 = arith.extui %0 : i1 to i32
    %c0_i32_0 = arith.constant 0 : i32
    %2 = arith.cmpi ne, %1, %c0_i32_0 : i32
    scf.if %2 {
      %c0_25 = arith.constant 0 : index
      %c0_26 = arith.constant 0 : index
      %51 = vector.load %arg1[%c0_25, %c0_26] : memref<8x128xbf16, #tpu.memory_space<vmem>>, vector<8x128xbf16>
      %c0_27 = arith.constant 0 : index
      %c0_28 = arith.constant 0 : index
      %52 = vector.load %arg8[%c0_27, %c0_28] : memref<8x256xbf16, #tpu.memory_space<vmem>>, vector<8x128xbf16>
      tpu.vector_store %arg8[%c0_27, %c0_28], %51 {strides = array<i32>} : memref<8x256xbf16, #tpu.memory_space<vmem>>, vector<8x128xbf16>,
    } else {
    }
    %c0 = arith.constant 0 : index
    %c0_1 = arith.constant 0 : index
    %c0_2 = arith.constant 0 : index
    %3 = vector.load %arg2[%c0, %c0_1, %c0_2] : memref<1x8x128xf32, #tpu.memory_space<vmem>>, vector<1x8x128xf32>
    %4 = vector.shape_cast %3 : vector<1x8x128xf32> to vector<8x128xf32>
    %5 = arith.truncf %4 : vector<8x128xf32> to vector<8x128xbf16>
    %c0_3 = arith.constant 0 : index
    %c128 = arith.constant 128 : index
    %6 = vector.load %arg8[%c0_3, %c128] : memref<8x256xbf16, #tpu.memory_space<vmem>>, vector<8x128xbf16>
    tpu.vector_store %arg8[%c0_3, %c128], %5 {strides = array<i32>} : memref<8x256xbf16, #tpu.memory_space<vmem>>, vector<8x128xbf16>,
    %c0_4 = arith.constant 0 : index
    %c0_5 = arith.constant 0 : index
    %7 = vector.load %arg8[%c0_4, %c0_5] : memref<8x256xbf16, #tpu.memory_space<vmem>>, vector<8x256xbf16>
    %c0_6 = arith.constant 0 : index
    %c0_7 = arith.constant 0 : index
    %c0_8 = arith.constant 0 : index
    %8 = vector.load %arg4[%c0_6, %c0_7, %c0_8] : memref<1x256x512xbf16, #tpu.memory_space<vmem>>, vector<1x256x512xbf16>
    %9 = vector.shape_cast %8 : vector<1x256x512xbf16> to vector<256x512xbf16>
    %cst = arith.constant dense<0.000000e+00> : vector<8x512xf32>
    %10 = tpu.matmul %7, %9, %cst {dimension_numbers = #tpu.dot_dimension_numbers<[1], [0], [0], [1], [0, 0, 1, 1], [], []>} : vector<8x256xbf16>, vector<256x512xbf16>, vector<8x512xf32> -> vector<8x512xf32>
    %c0_9 = arith.constant 0 : index
    %c0_10 = arith.constant 0 : index
    %c0_11 = arith.constant 0 : index
    %11 = vector.load %arg5[%c0_9, %c0_10, %c0_11] : memref<1x1x512xf32, #tpu.memory_space<vmem>>, vector<1x1x512xf32>
    %12 = vector.shape_cast %11 : vector<1x1x512xf32> to vector<1x512xf32>
    %13 = vector.broadcast %12 : vector<1x512xf32> to vector<8x512xf32>
    %14 = arith.addf %10, %13 : vector<8x512xf32>
    %15 = vector.extract_strided_slice %14 {offsets = [0, 0], sizes = [8, 128], strides = [1, 1]} : vector<8x512xf32> to vector<8x128xf32>
    %16 = arith.negf %15 : vector<8x128xf32>
    %17 = math.exp %16 : vector<8x128xf32>
    %cst_12 = arith.constant 1.000000e+00 : f32
    %18 = vector.broadcast %cst_12 : f32 to vector<8x128xf32>
    %19 = arith.addf %18, %17 : vector<8x128xf32>
    %20 = arith.divf %18, %19 : vector<8x128xf32>
    %21 = vector.extract_strided_slice %14 {offsets = [0, 128], sizes = [8, 128], strides = [1, 1]} : vector<8x512xf32> to vector<8x128xf32>
    %22 = arith.negf %21 : vector<8x128xf32>
    %23 = math.exp %22 : vector<8x128xf32>
    %cst_13 = arith.constant 1.000000e+00 : f32
    %24 = vector.broadcast %cst_13 : f32 to vector<8x128xf32>
    %25 = arith.addf %24, %23 : vector<8x128xf32>
    %26 = arith.divf %24, %25 : vector<8x128xf32>
    %27 = vector.extract_strided_slice %14 {offsets = [0, 256], sizes = [8, 128], strides = [1, 1]} : vector<8x512xf32> to vector<8x128xf32>
    %28 = math.tanh %27 : vector<8x128xf32>
    %29 = vector.extract_strided_slice %14 {offsets = [0, 384], sizes = [8, 128], strides = [1, 1]} : vector<8x512xf32> to vector<8x128xf32>
    %30 = arith.negf %29 : vector<8x128xf32>
    %31 = math.exp %30 : vector<8x128xf32>
    %cst_14 = arith.constant 1.000000e+00 : f32
    %32 = vector.broadcast %cst_14 : f32 to vector<8x128xf32>
    %33 = arith.addf %32, %31 : vector<8x128xf32>
    %34 = arith.divf %32, %33 : vector<8x128xf32>
    %c0_15 = arith.constant 0 : index
    %c0_16 = arith.constant 0 : index
    %c0_17 = arith.constant 0 : index
    %35 = vector.load %arg3[%c0_15, %c0_16, %c0_17] : memref<1x8x128xf32, #tpu.memory_space<vmem>>, vector<1x8x128xf32>
    %36 = vector.shape_cast %35 : vector<1x8x128xf32> to vector<8x128xf32>
    %37 = arith.mulf %26, %36 : vector<8x128xf32>
    %38 = arith.mulf %20, %28 : vector<8x128xf32>
    %39 = arith.addf %37, %38 : vector<8x128xf32>
    %40 = math.tanh %39 : vector<8x128xf32>
    %41 = arith.mulf %34, %40 : vector<8x128xf32>
    %c0_18 = arith.constant 0 : index
    %c0_19 = arith.constant 0 : index
    %c0_20 = arith.constant 0 : index
    %42 = vector.load %arg6[%c0_18, %c0_19, %c0_20] : memref<1x8x128xf32, #tpu.memory_space<vmem>>, vector<1x8x128xf32>
    %43 = vector.shape_cast %42 : vector<1x8x128xf32> to vector<8x128xf32>
    %44 = vector.shape_cast %41 : vector<8x128xf32> to vector<1x8x128xf32>
    tpu.vector_store %arg6[%c0_18, %c0_19, %c0_20], %44 {strides = array<i32>} : memref<1x8x128xf32, #tpu.memory_space<vmem>>, vector<1x8x128xf32>,
    %c0_21 = arith.constant 0 : index
    %c0_22 = arith.constant 0 : index
    %c0_23 = arith.constant 0 : index
    %45 = vector.load %arg7[%c0_21, %c0_22, %c0_23] : memref<1x8x128xf32, #tpu.memory_space<vmem>>, vector<1x8x128xf32>
    %46 = vector.shape_cast %45 : vector<1x8x128xf32> to vector<8x128xf32>
    %47 = vector.shape_cast %39 : vector<8x128xf32> to vector<1x8x128xf32>
    tpu.vector_store %arg7[%c0_21, %c0_22, %c0_23], %47 {strides = array<i32>} : memref<1x8x128xf32, #tpu.memory_space<vmem>>, vector<1x8x128xf32>,
    %c2_i32 = arith.constant 2 : i32
    %48 = arith.cmpi slt, %arg0, %c2_i32 : i32
    %49 = arith.extui %48 : i1 to i32
    %c0_i32_24 = arith.constant 0 : i32
    %50 = arith.cmpi ne, %49, %c0_i32_24 : i32
    scf.if %50 {
      %51 = arith.truncf %41 : vector<8x128xf32> to vector<8x128xbf16>
      %c0_25 = arith.constant 0 : index
      %c0_26 = arith.constant 0 : index
      %52 = vector.load %arg8[%c0_25, %c0_26] : memref<8x256xbf16, #tpu.memory_space<vmem>>, vector<8x128xbf16>
      tpu.vector_store %arg8[%c0_25, %c0_26], %51 {strides = array<i32>} : memref<8x256xbf16, #tpu.memory_space<vmem>>, vector<8x128xbf16>,
    } else {
    }
    return
  }
  func.func @transform_0(%arg0: i32) -> (i32, i32) {
    %c0_i32 = arith.constant 0 : i32
    %c0_i32_0 = arith.constant 0 : i32
    %c0_i32_1 = arith.constant 0 : i32
    return %c0_i32, %c0_i32_0 : i32, i32
  }
  func.func @transform_1(%arg0: i32) -> (i32, i32, i32) {
    %c0_i32 = arith.constant 0 : i32
    %c0_i32_0 = arith.constant 0 : i32
    %c0_i32_1 = arith.constant 0 : i32
    return %arg0, %c0_i32, %c0_i32_0 : i32, i32, i32
  }
  func.func @transform_2(%arg0: i32) -> (i32, i32, i32) {
    %c0_i32 = arith.constant 0 : i32
    %c0_i32_0 = arith.constant 0 : i32
    %c0_i32_1 = arith.constant 0 : i32
    return %arg0, %c0_i32, %c0_i32_0 : i32, i32, i32
  }
  func.func @transform_3(%arg0: i32) -> (i32, i32, i32) {
    %c0_i32 = arith.constant 0 : i32
    %c0_i32_0 = arith.constant 0 : i32
    %c0_i32_1 = arith.constant 0 : i32
    return %arg0, %c0_i32, %c0_i32_0 : i32, i32, i32
  }
  func.func @transform_4(%arg0: i32) -> (i32, i32, i32) {
    %c0_i32 = arith.constant 0 : i32
    %c0_i32_0 = arith.constant 0 : i32
    %c0_i32_1 = arith.constant 0 : i32
    return %arg0, %c0_i32, %c0_i32_0 : i32, i32, i32
  }
  func.func @transform_5(%arg0: i32) -> (i32, i32, i32) {
    %c0_i32 = arith.constant 0 : i32
    %c0_i32_0 = arith.constant 0 : i32
    %c0_i32_1 = arith.constant 0 : i32
    return %arg0, %c0_i32, %c0_i32_0 : i32, i32, i32
  }
  func.func @transform_6(%arg0: i32) -> (i32, i32, i32) {
    %c0_i32 = arith.constant 0 : i32
    %c0_i32_0 = arith.constant 0 : i32
    %c0_i32_1 = arith.constant 0 : i32
    return %arg0, %c0_i32, %c0_i32_0 : i32, i32, i32
  }
}

</mosaic_0001>

<llo_original>
// kernel: tpu_custom_call.1
$region0: #{tpu_custom_call.1}
  #allocation0 [shape = 'u32[]', space=smem, size = 0x4, offset = 0x4, fixed_abs, tag = 'smem constant byte address 0x4 - core index']
  #allocation1 [shape = 'u32[144,128]{1,0:T(1,128)}', space=vmem, size = 0x12000, scoped, tag = 'internal scratch']
  #allocation2 [shape = 'bf16[8,256]{1,0:T(8,128)(2,1)}', space=vmem, size = 0x1000, scoped, tag = 'scratch operand']
  %s0 = inlined_call_operand.hbm [shape: bf16[8,128], index: 0, kind: input, shape index: {}]
  %s1 = inlined_call_operand.hbm [shape: f32[3,8,128], index: 1, kind: input, shape index: {}]
  %s2 = inlined_call_operand.hbm [shape: f32[3,8,128], index: 2, kind: input, shape index: {}]
  %s3 = inlined_call_operand.hbm [shape: bf16[3,256,512], index: 3, kind: input, shape index: {}]
  %s4 = inlined_call_operand.vmem [shape: f32[3,1,512], index: 4, kind: input, shape index: {}]
  %s5 = inlined_call_operand.hbm [shape: f32[3,8,128], index: 5, kind: output, shape index: {0}]
  %s6 = inlined_call_operand.hbm [shape: f32[3,8,128], index: 6, kind: output, shape index: {1}]
  %7 = xla_tuple %s5, %s6
  %s8 = sld [smem:[#allocation0]]
  $region85: #{tpu_custom_call.1} parent=0
    _
  %s10 = ssub.s32 1, %s8
  %s11 = scalar_select 0, %s10, %s8
  $region1: #{tpu_custom_call.1} parent=0
    #allocation3 [shape = 'u8[2048]{0}', space=vmem, size = 0x800, scoped, tag = 'input window, operand 0, single buffered']
    #allocation4 [shape = 's32[2]{0}', space=sflag, size = 0x8, scoped, tag = 'scoped memory for tpu_custom_call.1']
    #allocation5 [shape = 's32[2]{0}', space=sflag, size = 0x8, scoped, tag = 'scoped memory for tpu_custom_call.1']
    #allocation6 [shape = 'u8[8192]{0}', space=vmem, size = 0x2000, scoped, tag = 'input window, operand 1']
    #allocation7 [shape = 's32[2]{0}', space=sflag, size = 0x8, scoped, tag = 'scoped memory for tpu_custom_call.1']
    #allocation8 [shape = 'u8[8192]{0}', space=vmem, size = 0x2000, scoped, tag = 'input window, operand 2']
    #allocation9 [shape = 'u8[524288]{0}', space=vmem, size = 0x80000, scoped, tag = 'input window, operand 3']
    #allocation10 [shape = 's32[2]{0}', space=sflag, size = 0x8, scoped, tag = 'scoped memory for tpu_custom_call.1']
    #allocation11 [shape = 'u8[8192]{0}', space=vmem, size = 0x2000, scoped, tag = 'output window, operand 0']
    #allocation12 [shape = 'u8[8192]{0}', space=vmem, size = 0x2000, scoped, tag = 'output window, operand 1']
    #allocation13 [shape = 's32[2]{0}', space=sflag, size = 0x8, scoped, tag = 'scoped memory for tpu_custom_call.1']
    %12 = vsyncpa [#allocation4], 0
    %13 = vsyncpa [#allocation7], 0
    %s14 = scalar_lea.sflag [#allocation7], 1
    %15 = vsyncpa %s14, 0
    %16 = vsyncpa [#allocation10], 0
    %s17 = scalar_lea.sflag [#allocation10], 1
    %18 = vsyncpa %s17, 0
    %19 = vsyncpa [#allocation5], 0
    %s20 = scalar_lea.sflag [#allocation5], 1
    %21 = vsyncpa %s20, 0
    %22 = vsyncpa [#allocation13], 0
    %s23 = scalar_lea.sflag [#allocation13], 1
    %24 = vsyncpa %s23, 0
    loop: start=0, step=1, limit=5
    $region2: #{tpu_custom_call.1} parent=1 // loop_pre_header
      _
    $region3: #{tpu_custom_call.1} parent=1 // loop_header
      %s26 = sphi 0, %s30
      %p27 = scmp.ge.s32.totalorder %s26, 5
      %s34 = sphi 0, %s34
      %s36 = sphi 0, %s34
      %s37 = sphi 0, %s36
      %s51 = sphi 0, %s37
      %s57 = sphi 0, %s59
      %s60 = sphi 0, %s57
      %s61 = sphi 0, %s60
      %s77 = sphi 0, %s61
      %s83 = sphi 0, %s85
      %s86 = sphi 0, %s83
      %s87 = sphi 0, %s86
      %s103 = sphi 0, %s87
      %s109 = sphi 0, %s111
      %s112 = sphi 0, %s109
      %s113 = sphi 0, %s112
      %s129 = sphi 0, %s113
      %s135 = sphi 0, %s137
      %s138 = sphi 0, %s135
      %s139 = sphi 0, %s138
      %s155 = sphi 0, %s139
      %s161 = sphi 0, %s163
      %s164 = sphi 0, %s161
      %s165 = sphi 0, %s164
      %s181 = sphi 0, %s165
      %s187 = sphi 0, %s189
      %s190 = sphi 0, %s187
      %s191 = sphi 0, %s190
      %s207 = sphi 0, %s191
    $region4: #{tpu_custom_call.1} parent=1 // loop_header_branch
      %29 = sbr.rel (%p27) target = $region8
    $region5: #{tpu_custom_call.1} parent=1 // loop_body
      %s31 = ssub.s32 %s26, 1
      %s32 = ssub.s32 %s26, 2
      %s33 = sadd.s32 %s26, 1
      %s35 = sadd.s32 %s34, 1
      %p38 = scmp.eq.s32.totalorder %s26, 2
      %p39 = scmp.ne.s32.totalorder %s34, %s36
      %p40 = scmp.eq.s32.totalorder %s26, 0
      %p41 = por %p39, %p40
      %p42 = scmp.ne.s32.totalorder %s34, %s36
      %p43 = scmp.eq.s32.totalorder %s31, 2
      %p44 = por %p42, %p43
      %p45 = scmp.ne.s32.totalorder %s36, %s37
      %p46 = scmp.eq.s32.totalorder %s31, 0
      %p47 = por %p45, %p46
      %p48 = scmp.ne.s32.totalorder %s36, %s37
      %p49 = scmp.eq.s32.totalorder %s32, 2
      %p50 = por %p48, %p49
      %p52 = scmp.ne.s32.totalorder %s37, %s51
      %p53 = scmp.eq.s32.totalorder %s32, 0
      %p54 = por %p52, %p53
      %s55 = ssub.s32 %s26, %s33
      %p56 = scmp.eq.s32.totalorder %s55, 0
      %s58 = sadd.s32 %s57, 1
      %s59 = scalar_select %p56, %s57, %s58
      %p62 = pneg %p56
      %p63 = scmp.eq.s32.totalorder %s26, 2
      %p64 = por %p62, %p63
      %p65 = scmp.ne.s32.totalorder %s57, %s60
      %p66 = scmp.eq.s32.totalorder %s26, 0
      %p67 = por %p65, %p66
      %p68 = scmp.ne.s32.totalorder %s57, %s60
      %p69 = scmp.eq.s32.totalorder %s31, 2
      %p70 = por %p68, %p69
      %p71 = scmp.ne.s32.totalorder %s60, %s61
      %p72 = scmp.eq.s32.totalorder %s31, 0
      %p73 = por %p71, %p72
      %p74 = scmp.ne.s32.totalorder %s60, %s61
      %p75 = scmp.eq.s32.totalorder %s32, 2
      %p76 = por %p74, %p75
      %p78 = scmp.ne.s32.totalorder %s61, %s77
      %p79 = scmp.eq.s32.totalorder %s32, 0
      %p80 = por %p78, %p79
      %s81 = ssub.s32 %s26, %s33
      %p82 = scmp.eq.s32.totalorder %s81, 0
      %s84 = sadd.s32 %s83, 1
      %s85 = scalar_select %p82, %s83, %s84
      %p88 = pneg %p82
      %p89 = scmp.eq.s32.totalorder %s26, 2
      %p90 = por %p88, %p89
      %p91 = scmp.ne.s32.totalorder %s83, %s86
      %p92 = scmp.eq.s32.totalorder %s26, 0
      %p93 = por %p91, %p92
      %p94 = scmp.ne.s32.totalorder %s83, %s86
      %p95 = scmp.eq.s32.totalorder %s31, 2
      %p96 = por %p94, %p95
      %p97 = scmp.ne.s32.totalorder %s86, %s87
      %p98 = scmp.eq.s32.totalorder %s31, 0
      %p99 = por %p97, %p98
      %p100 = scmp.ne.s32.totalorder %s86, %s87
      %p101 = scmp.eq.s32.totalorder %s32, 2
      %p102 = por %p100, %p101
      %p104 = scmp.ne.s32.totalorder %s87, %s103
      %p105 = scmp.eq.s32.totalorder %s32, 0
      %p106 = por %p104, %p105
      %s107 = ssub.s32 %s26, %s33
      %p108 = scmp.eq.s32.totalorder %s107, 0
      %s110 = sadd.s32 %s109, 1
      %s111 = scalar_select %p108, %s109, %s110
      %p114 = pneg %p108
      %p115 = scmp.eq.s32.totalorder %s26, 2
      %p116 = por %p114, %p115
      %p117 = scmp.ne.s32.totalorder %s109, %s112
      %p118 = scmp.eq.s32.totalorder %s26, 0
      %p119 = por %p117, %p118
      %p120 = scmp.ne.s32.totalorder %s109, %s112
      %p121 = scmp.eq.s32.totalorder %s31, 2
      %p122 = por %p120, %p121
      %p123 = scmp.ne.s32.totalorder %s112, %s113
      %p124 = scmp.eq.s32.totalorder %s31, 0
      %p125 = por %p123, %p124
      %p126 = scmp.ne.s32.totalorder %s112, %s113
      %p127 = scmp.eq.s32.totalorder %s32, 2
      %p128 = por %p126, %p127
      %p130 = scmp.ne.s32.totalorder %s113, %s129
      %p131 = scmp.eq.s32.totalorder %s32, 0
      %p132 = por %p130, %p131
      %s133 = ssub.s32 %s26, %s33
      %p134 = scmp.eq.s32.totalorder %s133, 0
      %s136 = sadd.s32 %s135, 1
      %s137 = scalar_select %p134, %s135, %s136
      %p140 = pneg %p134
      %p141 = scmp.eq.s32.totalorder %s26, 2
      %p142 = por %p140, %p141
      %p143 = scmp.ne.s32.totalorder %s135, %s138
      %p144 = scmp.eq.s32.totalorder %s26, 0
      %p145 = por %p143, %p144
      %p146 = scmp.ne.s32.totalorder %s135, %s138
      %p147 = scmp.eq.s32.totalorder %s31, 2
      %p148 = por %p146, %p147
      %p149 = scmp.ne.s32.totalorder %s138, %s139
      %p150 = scmp.eq.s32.totalorder %s31, 0
      %p151 = por %p149, %p150
      %p152 = scmp.ne.s32.totalorder %s138, %s139
      %p153 = scmp.eq.s32.totalorder %s32, 2
      %p154 = por %p152, %p153
      %p156 = scmp.ne.s32.totalorder %s139, %s155
      %p157 = scmp.eq.s32.totalorder %s32, 0
      %p158 = por %p156, %p157
      %s159 = ssub.s32 %s26, %s33
      %p160 = scmp.eq.s32.totalorder %s159, 0
      %s162 = sadd.s32 %s161, 1
      %s163 = scalar_select %p160, %s161, %s162
      %p166 = pneg %p160
      %p167 = scmp.eq.s32.totalorder %s26, 2
      %p168 = por %p166, %p167
      %p169 = scmp.ne.s32.totalorder %s161, %s164
      %p170 = scmp.eq.s32.totalorder %s26, 0
      %p171 = por %p169, %p170
      %p172 = scmp.ne.s32.totalorder %s161, %s164
      %p173 = scmp.eq.s32.totalorder %s31, 2
      %p174 = por %p172, %p173
      %p175 = scmp.ne.s32.totalorder %s164, %s165
      %p176 = scmp.eq.s32.totalorder %s31, 0
      %p177 = por %p175, %p176
      %p178 = scmp.ne.s32.totalorder %s164, %s165
      %p179 = scmp.eq.s32.totalorder %s32, 2
      %p180 = por %p178, %p179
      %p182 = scmp.ne.s32.totalorder %s165, %s181
      %p183 = scmp.eq.s32.totalorder %s32, 0
      %p184 = por %p182, %p183
      %s185 = ssub.s32 %s26, %s33
      %p186 = scmp.eq.s32.totalorder %s185, 0
      %s188 = sadd.s32 %s187, 1
      %s189 = scalar_select %p186, %s187, %s188
      %p192 = pneg %p186
      %p193 = scmp.eq.s32.totalorder %s26, 2
      %p194 = por %p192, %p193
      %p195 = scmp.ne.s32.totalorder %s187, %s190
      %p196 = scmp.eq.s32.totalorder %s26, 0
      %p197 = por %p195, %p196
      %p198 = scmp.ne.s32.totalorder %s187, %s190
      %p199 = scmp.eq.s32.totalorder %s31, 2
      %p200 = por %p198, %p199
      %p201 = scmp.ne.s32.totalorder %s190, %s191
      %p202 = scmp.eq.s32.totalorder %s31, 0
      %p203 = por %p201, %p202
      %p204 = scmp.ne.s32.totalorder %s190, %s191
      %p205 = scmp.eq.s32.totalorder %s32, 2
      %p206 = por %p204, %p205
      %p208 = scmp.ne.s32.totalorder %s191, %s207
      %p209 = scmp.eq.s32.totalorder %s32, 0
      %p210 = por %p208, %p209
      %p211 = scmp.le.s32.totalorder 1, %s26
      %p212 = scmp.lt.s32.totalorder %s26, 4
      %p213 = pnand %p211, %p212
      %p214 = pneg %p213
      // Predicated region
      $region9: #{tpu_custom_call.1} parent=5 // pred_check
        _
      $region10: #{tpu_custom_call.1} parent=5 // pred_check_branch
        %216 = sbr.rel (%p213) target = $region12
      $region11: #{tpu_custom_call.1} parent=5 // pred_region
        %s217 = ssub.s32 %s26, 1
        // Predicated region
        $region13: #{tpu_custom_call.1} parent=11 // pred_check
          %p218 = pneg %p47
        $region14: #{tpu_custom_call.1} parent=11 // pred_check_branch
          %220 = sbr.rel (%p218) target = $region16
        $region15: #{tpu_custom_call.1} parent=11 // pred_region
          %s222 = ssub.s32 64, 64
          %223 = vsyncadd [#allocation4], %s222
          %s225 = sshll.u32 [#allocation3], 4
          %s226 = int_to_ptr.vmem [resolvable:$true] %s225
          %228 = dma.hbm_to_vmem [thread:$0]  %s0, 64, %s226, [#allocation4]
        $region16: #{tpu_custom_call.1} parent=11 // pred_fallthru
          _
      $region12: #{tpu_custom_call.1} parent=5 // pred_fallthru
        _
      %p229 = scmp.lt.s32.totalorder %s26, 3
      // Predicated region
      $region17: #{tpu_custom_call.1} parent=5 // pred_check
        %p230 = pneg %p229
      $region18: #{tpu_custom_call.1} parent=5 // pred_check_branch
        %232 = sbr.rel (%p230) target = $region20
      $region19: #{tpu_custom_call.1} parent=5 // pred_region
        // Predicated region
        $region21: #{tpu_custom_call.1} parent=19 // pred_check
          %p233 = pneg %p67
        $region22: #{tpu_custom_call.1} parent=19 // pred_check_branch
          %235 = sbr.rel (%p233) target = $region24
        $region23: #{tpu_custom_call.1} parent=19 // pred_region
          %s236 = sand.u32 %s26, 1
          %s237 = scalar_lea.sflag [#allocation7], %s236
          %s238 = sand.u32 %s57, 1
          %s239 = smul.addr %s238, 8
          %s240 = scalar_lea.vmem [#allocation6], %s239
          %s242 = ssub.s32 128, 128
          %243 = vsyncadd %s237, %s242
          %s244 = smul.addr %s26, 128
          %s245 = scalar_lea.hbm %s1, %s244
          %s247 = sshll.u32 %s240, 4
          %s248 = int_to_ptr.vmem [resolvable:$true] %s247
          %250 = dma.hbm_to_vmem [thread:$0]  %s245, 128, %s248, %s237
        $region24: #{tpu_custom_call.1} parent=19 // pred_fallthru
          _
        // Predicated region
        $region25: #{tpu_custom_call.1} parent=19 // pred_check
          %p251 = pneg %p93
        $region26: #{tpu_custom_call.1} parent=19 // pred_check_branch
          %253 = sbr.rel (%p251) target = $region28
        $region27: #{tpu_custom_call.1} parent=19 // pred_region
          %s254 = sand.u32 %s26, 1
          %s255 = scalar_lea.sflag [#allocation7], %s254
          %s256 = sand.u32 %s83, 1
          %s257 = smul.addr %s256, 8
          %s258 = scalar_lea.vmem [#allocation8], %s257
          %s260 = ssub.s32 128, 128
          %261 = vsyncadd %s255, %s260
          %s262 = smul.addr %s26, 128
          %s263 = scalar_lea.hbm %s2, %s262
          %s265 = sshll.u32 %s258, 4
          %s266 = int_to_ptr.vmem [resolvable:$true] %s265
          %268 = dma.hbm_to_vmem [thread:$0]  %s263, 128, %s266, %s255
        $region28: #{tpu_custom_call.1} parent=19 // pred_fallthru
          _
        // Predicated region
        $region29: #{tpu_custom_call.1} parent=19 // pred_check
          %p269 = pneg %p119
        $region30: #{tpu_custom_call.1} parent=19 // pred_check_branch
          %271 = sbr.rel (%p269) target = $region32
        $region31: #{tpu_custom_call.1} parent=19 // pred_region
          %s272 = sand.u32 %s109, 1
          %s273 = scalar_lea.sflag [#allocation10], %s272
          %s274 = sand.u32 %s109, 1
          %s275 = smul.addr %s274, 512
          %s276 = scalar_lea.vmem [#allocation9], %s275
          %s278 = ssub.s32 8192, 8192
          %279 = vsyncadd %s273, %s278
          %s280 = smul.addr %s26, 128
          %s281 = smul.addr %s280, 64
          %s282 = scalar_lea.hbm %s3, %s281
          %s283 = sshll.u32 %s276, 4
          %s284 = int_to_ptr.vmem [resolvable:$true] %s283
          %289 = dma.hbm_to_vmem [thread:$0]  %s282, 8192, %s284, %s273, 256, 256, 16
        $region32: #{tpu_custom_call.1} parent=19 // pred_fallthru
          _
        // Predicated region
        $region33: #{tpu_custom_call.1} parent=19 // pred_check
          %p290 = pneg %p145
        $region34: #{tpu_custom_call.1} parent=19 // pred_check_branch
          %292 = sbr.rel (%p290) target = $region36
        $region35: #{tpu_custom_call.1} parent=19 // pred_region
          %p293 = scmp.lt.s32.totalorder %s26, 2
          %s294 = scalar_select %p293, %s26, 2
          %s295 = smul.addr %s294, 4
          %s296 = scalar_lea.vmem %s4, %s295
        $region36: #{tpu_custom_call.1} parent=19 // pred_fallthru
          _
      $region20: #{tpu_custom_call.1} parent=5 // pred_fallthru
        _
      %p297 = scmp.le.s32.totalorder 1, %s26
      %p298 = scmp.lt.s32.totalorder %s26, 4
      %p299 = pnand %p297, %p298
      %p300 = pneg %p299
      // Predicated region
      $region37: #{tpu_custom_call.1} parent=5 // pred_check
        _
      $region38: #{tpu_custom_call.1} parent=5 // pred_check_branch
        %302 = sbr.rel (%p299) target = $region40
      $region39: #{tpu_custom_call.1} parent=5 // pred_region
        %s303 = ssub.s32 %s26, 1
        // Predicated region
        $region41: #{tpu_custom_call.1} parent=39 // pred_check
          %p304 = pneg %p47
        $region42: #{tpu_custom_call.1} parent=39 // pred_check_branch
          %306 = sbr.rel (%p304) target = $region44
        $region43: #{tpu_custom_call.1} parent=39 // pred_region
          %307 = dma.done [#allocation4], 64
        $region44: #{tpu_custom_call.1} parent=39 // pred_fallthru
          _
        %s308 = sand.u32 %s31, 1
        %s309 = scalar_lea.sflag [#allocation7], %s308
        %s310 = sand.u32 %s60, 1
        %s311 = smul.addr %s310, 8
        %s312 = scalar_lea.vmem [#allocation6], %s311
        // Predicated region
        $region45: #{tpu_custom_call.1} parent=39 // pred_check
          %p313 = pneg %p73
        $region46: #{tpu_custom_call.1} parent=39 // pred_check_branch
          %315 = sbr.rel (%p313) target = $region48
        $region47: #{tpu_custom_call.1} parent=39 // pred_region
          %316 = dma.done %s309, 128
        $region48: #{tpu_custom_call.1} parent=39 // pred_fallthru
          _
        %s317 = sand.u32 %s31, 1
        %s318 = scalar_lea.sflag [#allocation7], %s317
        %s319 = sand.u32 %s86, 1
        %s320 = smul.addr %s319, 8
        %s321 = scalar_lea.vmem [#allocation8], %s320
        // Predicated region
        $region49: #{tpu_custom_call.1} parent=39 // pred_check
          %p322 = pneg %p99
        $region50: #{tpu_custom_call.1} parent=39 // pred_check_branch
          %324 = sbr.rel (%p322) target = $region52
        $region51: #{tpu_custom_call.1} parent=39 // pred_region
          %325 = dma.done %s318, 128
        $region52: #{tpu_custom_call.1} parent=39 // pred_fallthru
          _
        %s326 = sand.u32 %s112, 1
        %s327 = scalar_lea.sflag [#allocation10], %s326
        %s328 = sand.u32 %s112, 1
        %s329 = smul.addr %s328, 512
        %s330 = scalar_lea.vmem [#allocation9], %s329
        // Predicated region
        $region53: #{tpu_custom_call.1} parent=39 // pred_check
          %p331 = pneg %p125
        $region54: #{tpu_custom_call.1} parent=39 // pred_check_branch
          %333 = sbr.rel (%p331) target = $region56
        $region55: #{tpu_custom_call.1} parent=39 // pred_region
          %334 = dma.done %s327, 8192
        $region56: #{tpu_custom_call.1} parent=39 // pred_fallthru
          _
        %p335 = pneg %p47
        %p336 = pneg %p44
        %s337 = sand.u32 %s31, 1
        %s338 = scalar_lea.sflag [#allocation7], %s337
        %s339 = sand.u32 %s60, 1
        %s340 = smul.addr %s339, 8
        %s341 = scalar_lea.vmem [#allocation6], %s340
        %p342 = pneg %p73
        %p343 = pneg %p70
        %s344 = sand.u32 %s31, 1
        %s345 = scalar_lea.sflag [#allocation7], %s344
        %s346 = sand.u32 %s86, 1
        %s347 = smul.addr %s346, 8
        %s348 = scalar_lea.vmem [#allocation8], %s347
        %p349 = pneg %p99
        %p350 = pneg %p96
        %s351 = sand.u32 %s112, 1
        %s352 = scalar_lea.sflag [#allocation10], %s351
        %s353 = sand.u32 %s112, 1
        %s354 = smul.addr %s353, 512
        %s355 = scalar_lea.vmem [#allocation9], %s354
        %p356 = pneg %p125
        %p357 = pneg %p122
        %p358 = scmp.lt.s32.totalorder %s31, 2
        %s359 = scalar_select %p358, %s31, 2
        %s360 = smul.addr %s359, 4
        %s361 = scalar_lea.vmem %s4, %s360
        %p362 = pneg %p151
        %p363 = pneg %p148
        %p364 = pneg %p177
        %p365 = pneg %p174
        %s366 = sand.u32 %s164, 1
        %s367 = scalar_lea.sflag [#allocation5], %s366
        %s368 = sand.u32 %s164, 1
        %s369 = smul.addr %s368, 8
        %s370 = scalar_lea.vmem [#allocation11], %s369
        %p371 = pneg %p203
        %p372 = pneg %p200
        %s373 = sand.u32 %s190, 1
        %s374 = scalar_lea.sflag [#allocation13], %s373
        %s375 = sand.u32 %s190, 1
        %s376 = smul.addr %s375, 8
        %s377 = scalar_lea.vmem [#allocation12], %s376
        %p378 = scmp.lt.s32.totalorder %s31, 2
        %s379 = scalar_select %p378, %s31, 2
        %s380 = smul.addr %s379, 4
        %s381 = scalar_lea.vmem %s4, %s380
        %p382 = scmp.eq.s32.totalorder %s31, 0
        // Predicated region
        $region57: #{tpu_custom_call.1} parent=39 // pred_check
          %p383 = pneg %p382
        $region58: #{tpu_custom_call.1} parent=39 // pred_check_branch
          %385 = sbr.rel (%p383) target = $region60
        $region59: #{tpu_custom_call.1} parent=39 // pred_region
          %v386 = vld [vmem:[#allocation3] sm:$0xf]
          %387 = vst [vmem:[#allocation2] sm:$0xf] %v386
        $region60: #{tpu_custom_call.1} parent=39 // pred_fallthru
          _
        %v388 = vld [vmem:[%s312] sm:$0xff]
        %v389 = vpack.c.bf16 %v388, %v388
        %390 = vst [vmem:[#allocation2 + $0x4] sm:$0xf] %v389
        %v391 = vld [vmem:[#allocation2] sm:$0xff]
        %v392 = vld [vmem:[%s330] sm:$0xff]
        %v393 = vld [vmem:[%s330 + $0x8] sm:$0xff]
        %v394 = vld [vmem:[%s330 + $0x10] sm:$0xff]
        %v395 = vld [vmem:[%s330 + $0x18] sm:$0xff]
        %v396 = vld [vmem:[%s330 + $0x20] sm:$0xff]
        %v397 = vld [vmem:[%s330 + $0x28] sm:$0xff]
        %v398 = vld [vmem:[%s330 + $0x30] sm:$0xff]
        %v399 = vld [vmem:[%s330 + $0x38] sm:$0xff]
        %v400 = vld [vmem:[%s330 + $0x40] sm:$0xff]
        %v401 = vld [vmem:[%s330 + $0x48] sm:$0xff]
        %v402 = vld [vmem:[%s330 + $0x50] sm:$0xff]
        %v403 = vld [vmem:[%s330 + $0x58] sm:$0xff]
        %v404 = vld [vmem:[%s330 + $0x60] sm:$0xff]
        %v405 = vld [vmem:[%s330 + $0x68] sm:$0xff]
        %v406 = vld [vmem:[%s330 + $0x70] sm:$0xff]
        %v407 = vld [vmem:[%s330 + $0x78] sm:$0xff]
        %v408 = vld [vmem:[%s330 + $0x80] sm:$0xff]
        %v409 = vld [vmem:[%s330 + $0x88] sm:$0xff]
        %v410 = vld [vmem:[%s330 + $0x90] sm:$0xff]
        %v411 = vld [vmem:[%s330 + $0x98] sm:$0xff]
        %v412 = vld [vmem:[%s330 + $0xa0] sm:$0xff]
        %v413 = vld [vmem:[%s330 + $0xa8] sm:$0xff]
        %v414 = vld [vmem:[%s330 + $0xb0] sm:$0xff]
        %v415 = vld [vmem:[%s330 + $0xb8] sm:$0xff]
        %v416 = vld [vmem:[%s330 + $0xc0] sm:$0xff]
        %v417 = vld [vmem:[%s330 + $0xc8] sm:$0xff]
        %v418 = vld [vmem:[%s330 + $0xd0] sm:$0xff]
        %v419 = vld [vmem:[%s330 + $0xd8] sm:$0xff]
        %v420 = vld [vmem:[%s330 + $0xe0] sm:$0xff]
        %v421 = vld [vmem:[%s330 + $0xe8] sm:$0xff]
        %v422 = vld [vmem:[%s330 + $0xf0] sm:$0xff]
        %v423 = vld [vmem:[%s330 + $0xf8] sm:$0xff]
        %v424 = vld [vmem:[%s330 + $0x100] sm:$0xff]
        %v425 = vld [vmem:[%s330 + $0x108] sm:$0xff]
        %v426 = vld [vmem:[%s330 + $0x110] sm:$0xff]
        %v427 = vld [vmem:[%s330 + $0x118] sm:$0xff]
        %v428 = vld [vmem:[%s330 + $0x120] sm:$0xff]
        %v429 = vld [vmem:[%s330 + $0x128] sm:$0xff]
        %v430 = vld [vmem:[%s330 + $0x130] sm:$0xff]
        %v431 = vld [vmem:[%s330 + $0x138] sm:$0xff]
        %v432 = vld [vmem:[%s330 + $0x140] sm:$0xff]
        %v433 = vld [vmem:[%s330 + $0x148] sm:$0xff]
        %v434 = vld [vmem:[%s330 + $0x150] sm:$0xff]
        %v435 = vld [vmem:[%s330 + $0x158] sm:$0xff]
        %v436 = vld [vmem:[%s330 + $0x160] sm:$0xff]
        %v437 = vld [vmem:[%s330 + $0x168] sm:$0xff]
        %v438 = vld [vmem:[%s330 + $0x170] sm:$0xff]
        %v439 = vld [vmem:[%s330 + $0x178] sm:$0xff]
        %v440 = vld [vmem:[%s330 + $0x180] sm:$0xff]
        %v441 = vld [vmem:[%s330 + $0x188] sm:$0xff]
        %v442 = vld [vmem:[%s330 + $0x190] sm:$0xff]
        %v443 = vld [vmem:[%s330 + $0x198] sm:$0xff]
        %v444 = vld [vmem:[%s330 + $0x1a0] sm:$0xff]
        %v445 = vld [vmem:[%s330 + $0x1a8] sm:$0xff]
        %v446 = vld [vmem:[%s330 + $0x1b0] sm:$0xff]
        %v447 = vld [vmem:[%s330 + $0x1b8] sm:$0xff]
        %v448 = vld [vmem:[%s330 + $0x1c0] sm:$0xff]
        %v449 = vld [vmem:[%s330 + $0x1c8] sm:$0xff]
        %v450 = vld [vmem:[%s330 + $0x1d0] sm:$0xff]
        %v451 = vld [vmem:[%s330 + $0x1d8] sm:$0xff]
        %v452 = vld [vmem:[%s330 + $0x1e0] sm:$0xff]
        %v453 = vld [vmem:[%s330 + $0x1e8] sm:$0xff]
        %v454 = vld [vmem:[%s330 + $0x1f0] sm:$0xff]
        %v455 = vld [vmem:[%s330 + $0x1f8] sm:$0xff]
        %v456 = vld [vmem:[%s381] sm:$0xf]
        %v458 = vlaneseq
        %v459 = vshrl.u32 %v458, 7
        %v460 = vsub.s32 0, %v459
        %v461 = vrot.slane %v456, %v460
        %v462 = vlaneseq
        %v463 = vshrl.u32 %v462, 7
        %v464 = vsub.s32 1, %v463
        %v465 = vrot.slane %v456, %v464
        %v466 = vlaneseq
        %v467 = vshrl.u32 %v466, 7
        %v468 = vsub.s32 2, %v467
        %v469 = vrot.slane %v456, %v468
        %v470 = vlaneseq
        %v471 = vshrl.u32 %v470, 7
        %v472 = vsub.s32 3, %v471
        %v473 = vrot.slane %v456, %v472
        %v479 = vunpack.c.l.b16 %v391
        %v480 = vunpack.c.h.b16 %v391
        %v481 = vpack.c.b16 %v479, %v479
        %v482 = vpack.c.b16 %v480, %v480
        %v549 = vunpack.c.l.b16 %v392
        %v550 = vunpack.c.h.b16 %v392
        %v551 = vunpack.c.l.b16 %v393
        %v552 = vunpack.c.h.b16 %v393
        %v553 = vunpack.c.l.b16 %v394
        %v554 = vunpack.c.h.b16 %v394
        %v555 = vunpack.c.l.b16 %v395
        %v556 = vunpack.c.h.b16 %v395
        %v557 = vunpack.c.l.b16 %v396
        %v558 = vunpack.c.h.b16 %v396
        %v559 = vunpack.c.l.b16 %v397
        %v560 = vunpack.c.h.b16 %v397
        %v561 = vunpack.c.l.b16 %v398
        %v562 = vunpack.c.h.b16 %v398
        %v563 = vunpack.c.l.b16 %v399
        %v564 = vunpack.c.h.b16 %v399
        %v565 = vunpack.c.l.b16 %v400
        %v566 = vunpack.c.h.b16 %v400
        %v567 = vunpack.c.l.b16 %v401
        %v568 = vunpack.c.h.b16 %v401
        %v569 = vunpack.c.l.b16 %v402
        %v570 = vunpack.c.h.b16 %v402
        %v571 = vunpack.c.l.b16 %v403
        %v572 = vunpack.c.h.b16 %v403
        %v573 = vunpack.c.l.b16 %v404
        %v574 = vunpack.c.h.b16 %v404
        %v575 = vunpack.c.l.b16 %v405
        %v576 = vunpack.c.h.b16 %v405
        %v577 = vunpack.c.l.b16 %v406
        %v578 = vunpack.c.h.b16 %v406
        %v579 = vunpack.c.l.b16 %v407
        %v580 = vunpack.c.h.b16 %v407
        %v581 = vunpack.c.l.b16 %v408
        %v582 = vunpack.c.h.b16 %v408
        %v583 = vunpack.c.l.b16 %v409
        %v584 = vunpack.c.h.b16 %v409
        %v585 = vunpack.c.l.b16 %v410
        %v586 = vunpack.c.h.b16 %v410
        %v587 = vunpack.c.l.b16 %v411
        %v588 = vunpack.c.h.b16 %v411
        %v589 = vunpack.c.l.b16 %v412
        %v590 = vunpack.c.h.b16 %v412
        %v591 = vunpack.c.l.b16 %v413
        %v592 = vunpack.c.h.b16 %v413
        %v593 = vunpack.c.l.b16 %v414
        %v594 = vunpack.c.h.b16 %v414
        %v595 = vunpack.c.l.b16 %v415
        %v596 = vunpack.c.h.b16 %v415
        %v597 = vunpack.c.l.b16 %v416
        %v598 = vunpack.c.h.b16 %v416
        %v599 = vunpack.c.l.b16 %v417
        %v600 = vunpack.c.h.b16 %v417
        %v601 = vunpack.c.l.b16 %v418
        %v602 = vunpack.c.h.b16 %v418
        %v603 = vunpack.c.l.b16 %v419
        %v604 = vunpack.c.h.b16 %v419
        %v605 = vunpack.c.l.b16 %v420
        %v606 = vunpack.c.h.b16 %v420
        %v607 = vunpack.c.l.b16 %v421
        %v608 = vunpack.c.h.b16 %v421
        %v609 = vunpack.c.l.b16 %v422
        %v610 = vunpack.c.h.b16 %v422
        %v611 = vunpack.c.l.b16 %v423
        %v612 = vunpack.c.h.b16 %v423
        %v613 = vunpack.c.l.b16 %v424
        %v614 = vunpack.c.h.b16 %v424
        %v615 = vunpack.c.l.b16 %v425
        %v616 = vunpack.c.h.b16 %v425
        %v617 = vunpack.c.l.b16 %v426
        %v618 = vunpack.c.h.b16 %v426
        %v619 = vunpack.c.l.b16 %v427
        %v620 = vunpack.c.h.b16 %v427
        %v621 = vunpack.c.l.b16 %v428
        %v622 = vunpack.c.h.b16 %v428
        %v623 = vunpack.c.l.b16 %v429
        %v624 = vunpack.c.h.b16 %v429
        %v625 = vunpack.c.l.b16 %v430
        %v626 = vunpack.c.h.b16 %v430
        %v627 = vunpack.c.l.b16 %v431
        %v628 = vunpack.c.h.b16 %v431
        %v629 = vunpack.c.l.b16 %v432
        %v630 = vunpack.c.h.b16 %v432
        %v631 = vunpack.c.l.b16 %v433
        %v632 = vunpack.c.h.b16 %v433
        %v633 = vunpack.c.l.b16 %v434
        %v634 = vunpack.c.h.b16 %v434
        %v635 = vunpack.c.l.b16 %v435
        %v636 = vunpack.c.h.b16 %v435
        %v637 = vunpack.c.l.b16 %v436
        %v638 = vunpack.c.h.b16 %v436
        %v639 = vunpack.c.l.b16 %v437
        %v640 = vunpack.c.h.b16 %v437
        %v641 = vunpack.c.l.b16 %v438
        %v642 = vunpack.c.h.b16 %v438
        %v643 = vunpack.c.l.b16 %v439
        %v644 = vunpack.c.h.b16 %v439
        %v645 = vunpack.c.l.b16 %v440
        %v646 = vunpack.c.h.b16 %v440
        %v647 = vunpack.c.l.b16 %v441
        %v648 = vunpack.c.h.b16 %v441
        %v649 = vunpack.c.l.b16 %v442
        %v650 = vunpack.c.h.b16 %v442
        %v651 = vunpack.c.l.b16 %v443
        %v652 = vunpack.c.h.b16 %v443
        %v653 = vunpack.c.l.b16 %v444
        %v654 = vunpack.c.h.b16 %v444
        %v655 = vunpack.c.l.b16 %v445
        %v656 = vunpack.c.h.b16 %v445
        %v657 = vunpack.c.l.b16 %v446
        %v658 = vunpack.c.h.b16 %v446
        %v659 = vunpack.c.l.b16 %v447
        %v660 = vunpack.c.h.b16 %v447
        %v661 = vunpack.c.l.b16 %v448
        %v662 = vunpack.c.h.b16 %v448
        %v663 = vunpack.c.l.b16 %v449
        %v664 = vunpack.c.h.b16 %v449
        %v665 = vunpack.c.l.b16 %v450
        %v666 = vunpack.c.h.b16 %v450
        %v667 = vunpack.c.l.b16 %v451
        %v668 = vunpack.c.h.b16 %v451
        %v669 = vunpack.c.l.b16 %v452
        %v670 = vunpack.c.h.b16 %v452
        %v671 = vunpack.c.l.b16 %v453
        %v672 = vunpack.c.h.b16 %v453
        %v673 = vunpack.c.l.b16 %v454
        %v674 = vunpack.c.h.b16 %v454
        %v675 = vunpack.c.l.b16 %v455
        %v676 = vunpack.c.h.b16 %v455
        %v677 = vpack.c.b16 %v553, %v549
        %v678 = vpack.c.b16 %v554, %v550
        %v679 = vpack.c.b16 %v555, %v551
        %v680 = vpack.c.b16 %v556, %v552
        %v681 = vpack.c.b16 %v561, %v557
        %v682 = vpack.c.b16 %v562, %v558
        %v683 = vpack.c.b16 %v563, %v559
        %v684 = vpack.c.b16 %v564, %v560
        %v685 = vpack.c.b16 %v569, %v565
        %v686 = vpack.c.b16 %v570, %v566
        %v687 = vpack.c.b16 %v571, %v567
        %v688 = vpack.c.b16 %v572, %v568
        %v689 = vpack.c.b16 %v577, %v573
        %v690 = vpack.c.b16 %v578, %v574
        %v691 = vpack.c.b16 %v579, %v575
        %v692 = vpack.c.b16 %v580, %v576
        %v693 = vpack.c.b16 %v585, %v581
        %v694 = vpack.c.b16 %v586, %v582
        %v695 = vpack.c.b16 %v587, %v583
        %v696 = vpack.c.b16 %v588, %v584
        %v697 = vpack.c.b16 %v593, %v589
        %v698 = vpack.c.b16 %v594, %v590
        %v699 = vpack.c.b16 %v595, %v591
        %v700 = vpack.c.b16 %v596, %v592
        %v701 = vpack.c.b16 %v601, %v597
        %v702 = vpack.c.b16 %v602, %v598
        %v703 = vpack.c.b16 %v603, %v599
        %v704 = vpack.c.b16 %v604, %v600
        %v705 = vpack.c.b16 %v609, %v605
        %v706 = vpack.c.b16 %v610, %v606
        %v707 = vpack.c.b16 %v611, %v607
        %v708 = vpack.c.b16 %v612, %v608
        %v709 = vpack.c.b16 %v617, %v613
        %v710 = vpack.c.b16 %v618, %v614
        %v711 = vpack.c.b16 %v619, %v615
        %v712 = vpack.c.b16 %v620, %v616
        %v713 = vpack.c.b16 %v625, %v621
        %v714 = vpack.c.b16 %v626, %v622
        %v715 = vpack.c.b16 %v627, %v623
        %v716 = vpack.c.b16 %v628, %v624
        %v717 = vpack.c.b16 %v633, %v629
        %v718 = vpack.c.b16 %v634, %v630
        %v719 = vpack.c.b16 %v635, %v631
        %v720 = vpack.c.b16 %v636, %v632
        %v721 = vpack.c.b16 %v641, %v637
        %v722 = vpack.c.b16 %v642, %v638
        %v723 = vpack.c.b16 %v643, %v639
        %v724 = vpack.c.b16 %v644, %v640
        %v725 = vpack.c.b16 %v649, %v645
        %v726 = vpack.c.b16 %v650, %v646
        %v727 = vpack.c.b16 %v651, %v647
        %v728 = vpack.c.b16 %v652, %v648
        %v729 = vpack.c.b16 %v657, %v653
        %v730 = vpack.c.b16 %v658, %v654
        %v731 = vpack.c.b16 %v659, %v655
        %v732 = vpack.c.b16 %v660, %v656
        %v733 = vpack.c.b16 %v665, %v661
        %v734 = vpack.c.b16 %v666, %v662
        %v735 = vpack.c.b16 %v667, %v663
        %v736 = vpack.c.b16 %v668, %v664
        %v737 = vpack.c.b16 %v673, %v669
        %v738 = vpack.c.b16 %v674, %v670
        %v739 = vpack.c.b16 %v675, %v671
        %v740 = vpack.c.b16 %v676, %v672
        %805 = vmatprep.subr.bf16.mxu0 %v678
        %806 = vmatpush1.bf16.msra.mxu0 %v677
        %807 = vmatprep.subr.bf16.mxu0 %v682
        %808 = vmatpush1.bf16.msra.mxu0 %v681
        %809 = vmatprep.subr.bf16.mxu0 %v686
        %810 = vmatpush1.bf16.msra.mxu0 %v685
        %811 = vmatprep.subr.bf16.mxu0 %v690
        %812 = vmatpush1.bf16.msra.mxu0 %v689
        %813 = vmatprep.subr.bf16.mxu0 %v694
        %814 = vmatpush1.bf16.msra.mxu0 %v693
        %815 = vmatprep.subr.bf16.mxu0 %v698
        %816 = vmatpush1.bf16.msra.mxu0 %v697
        %817 = vmatprep.subr.bf16.mxu0 %v702
        %818 = vmatpush1.bf16.msra.mxu0 %v701
        %819 = vmatprep.subr.bf16.mxu0 %v706
        %820 = vmatpush1.bf16.msra.mxu0 %v705
        %821 = vmatprep.subr.bf16.mxu0 %v710
        %822 = vmatpush1.bf16.msra.mxu0 %v709
        %823 = vmatprep.subr.bf16.mxu0 %v714
        %824 = vmatpush1.bf16.msra.mxu0 %v713
        %825 = vmatprep.subr.bf16.mxu0 %v718
        %826 = vmatpush1.bf16.msra.mxu0 %v717
        %827 = vmatprep.subr.bf16.mxu0 %v722
        %828 = vmatpush1.bf16.msra.mxu0 %v721
        %829 = vmatprep.subr.bf16.mxu0 %v726
        %830 = vmatpush1.bf16.msra.mxu0 %v725
        %831 = vmatprep.subr.bf16.mxu0 %v730
        %832 = vmatpush1.bf16.msra.mxu0 %v729
        %833 = vmatprep.subr.bf16.mxu0 %v734
        %834 = vmatpush1.bf16.msra.mxu0 %v733
        %835 = vmatprep.subr.bf16.mxu0 %v738
        %836 = vmatpush1.bf16.msra.mxu0 %v737
        %837 = vmatprep.mubr.bf16.mxu0 %v482
        %838 = vmatmul.mubr.bf16.gmra.mrb[0].mxu0 %v481
        %v839 = vpop.f32.mrb[0].mxu0
        %v840 = vadd.f32 %v461, %v839
        %v841 = vpop.f32.mrb[0].mxu0
        %v842 = vadd.f32 %v465, %v841
        %v843 = vpop.f32.mrb[0].mxu0
        %v844 = vpop.f32.mrb[0].mxu0
        %845 = vdwg.mxu0
        %846 = vmatprep.subr.bf16.mxu0 %v680
        %847 = vmatpush1.bf16.msra.mxu0 %v679
        %848 = vmatprep.subr.bf16.mxu0 %v684
        %849 = vmatpush1.bf16.msra.mxu0 %v683
        %850 = vmatprep.subr.bf16.mxu0 %v688
        %851 = vmatpush1.bf16.msra.mxu0 %v687
        %852 = vmatprep.subr.bf16.mxu0 %v692
        %853 = vmatpush1.bf16.msra.mxu0 %v691
        %854 = vmatprep.subr.bf16.mxu0 %v696
        %855 = vmatpush1.bf16.msra.mxu0 %v695
        %856 = vmatprep.subr.bf16.mxu0 %v700
        %857 = vmatpush1.bf16.msra.mxu0 %v699
        %858 = vmatprep.subr.bf16.mxu0 %v704
        %859 = vmatpush1.bf16.msra.mxu0 %v703
        %860 = vmatprep.subr.bf16.mxu0 %v708
        %861 = vmatpush1.bf16.msra.mxu0 %v707
        %862 = vmatprep.subr.bf16.mxu0 %v712
        %863 = vmatpush1.bf16.msra.mxu0 %v711
        %864 = vmatprep.subr.bf16.mxu0 %v716
        %865 = vmatpush1.bf16.msra.mxu0 %v715
        %866 = vmatprep.subr.bf16.mxu0 %v720
        %867 = vmatpush1.bf16.msra.mxu0 %v719
        %868 = vmatprep.subr.bf16.mxu0 %v724
        %869 = vmatpush1.bf16.msra.mxu0 %v723
        %870 = vmatprep.subr.bf16.mxu0 %v728
        %871 = vmatpush1.bf16.msra.mxu0 %v727
        %872 = vmatprep.subr.bf16.mxu0 %v732
        %873 = vmatpush1.bf16.msra.mxu0 %v731
        %874 = vmatprep.subr.bf16.mxu0 %v736
        %875 = vmatpush1.bf16.msra.mxu0 %v735
        %876 = vmatprep.subr.bf16.mxu0 %v740
        %877 = vmatpush1.bf16.msra.mxu0 %v739
        %878 = vmatprep.mubr.bf16.mxu0 %v482
        %879 = vmatmul.mubr.bf16.gmra.mrb[0].mxu0 %v481
        %v880 = vpop.f32.mrb[0].mxu0
        %v881 = vadd.f32 %v469, %v880
        %v882 = vpop.f32.mrb[0].mxu0
        %v883 = vadd.f32 %v473, %v882
        %v884 = vpop.f32.mrb[0].mxu0
        %v885 = vpop.f32.mrb[0].mxu0
        %886 = vdwg.mxu0
        %v887 = vxor.u32 %v840, 2147483648
        %v888 = vmul.f32 %v887, 1.442695
        %v889 = vpow.pop %v888
        %v890 = vadd.f32 %v889, 1.0
        %v891 = vrcp.pop %v890
        %v892 = vmul.f32 1.0, %v891
        %v893 = vxor.u32 %v842, 2147483648
        %v894 = vmul.f32 %v893, 1.442695
        %v895 = vpow.pop %v894
        %v896 = vadd.f32 %v895, 1.0
        %v897 = vrcp.pop %v896
        %v898 = vmul.f32 1.0, %v897
        %v899 = vtanh.pop %v881
        %v900 = vxor.u32 %v883, 2147483648
        %v901 = vmul.f32 %v900, 1.442695
        %v902 = vpow.pop %v901
        %v903 = vadd.f32 %v902, 1.0
        %v904 = vrcp.pop %v903
        %v905 = vmul.f32 1.0, %v904
        %v906 = vld [vmem:[%s321] sm:$0xff]
        %v907 = vmul.f32 %v898, %v906
        %v908 = vmul.f32 %v892, %v899
        %v909 = vadd.f32 %v907, %v908
        %v910 = vtanh.pop %v909
        %v911 = vmul.f32 %v905, %v910
        %912 = vst [vmem:[%s370] sm:$0xff] %v911
        %913 = vst [vmem:[%s377] sm:$0xff] %v909
        %p914 = scmp.lt.s32.totalorder %s31, 2
        // Predicated region
        $region61: #{tpu_custom_call.1} parent=39 // pred_check
          %p915 = pneg %p914
        $region62: #{tpu_custom_call.1} parent=39 // pred_check_branch
          %917 = sbr.rel (%p915) target = $region64
        $region63: #{tpu_custom_call.1} parent=39 // pred_region
          %v918 = vpack.c.bf16 %v911, %v911
          %919 = vst [vmem:[#allocation2] sm:$0xf] %v918
        $region64: #{tpu_custom_call.1} parent=39 // pred_fallthru
          _
        %s920 = sand.u32 %s164, 1
        %s921 = scalar_lea.sflag [#allocation5], %s920
        %s922 = sand.u32 %s164, 1
        %s923 = smul.addr %s922, 8
        %s924 = scalar_lea.vmem [#allocation11], %s923
        %s925 = sand.u32 %s190, 1
        %s926 = scalar_lea.sflag [#allocation13], %s925
        %s927 = sand.u32 %s190, 1
        %s928 = smul.addr %s927, 8
        %s929 = scalar_lea.vmem [#allocation12], %s928
        // Predicated region
        $region65: #{tpu_custom_call.1} parent=39 // pred_check
          %p930 = pneg %p174
        $region66: #{tpu_custom_call.1} parent=39 // pred_check_branch
          %932 = sbr.rel (%p930) target = $region68
        $region67: #{tpu_custom_call.1} parent=39 // pred_region
          %s934 = ssub.s32 128, 128
          %935 = vsyncadd %s921, %s934
          %s936 = smul.addr %s31, 128
          %s937 = scalar_lea.hbm %s5, %s936
          %s939 = sshll.u32 %s924, 4
          %s940 = int_to_ptr.vmem [resolvable:$true] %s939
          %942 = dma.vmem_to_hbm [thread:$0]  %s940, 128, %s937, %s921
        $region68: #{tpu_custom_call.1} parent=39 // pred_fallthru
          _
        // Predicated region
        $region69: #{tpu_custom_call.1} parent=39 // pred_check
          %p943 = pneg %p200
        $region70: #{tpu_custom_call.1} parent=39 // pred_check_branch
          %945 = sbr.rel (%p943) target = $region72
        $region71: #{tpu_custom_call.1} parent=39 // pred_region
          %s947 = ssub.s32 128, 128
          %948 = vsyncadd %s926, %s947
          %s949 = smul.addr %s31, 128
          %s950 = scalar_lea.hbm %s6, %s949
          %s952 = sshll.u32 %s929, 4
          %s953 = int_to_ptr.vmem [resolvable:$true] %s952
          %955 = dma.vmem_to_hbm [thread:$0]  %s953, 128, %s950, %s926
        $region72: #{tpu_custom_call.1} parent=39 // pred_fallthru
          _
      $region40: #{tpu_custom_call.1} parent=5 // pred_fallthru
        _
      %p956 = scmp.le.s32.totalorder 2, %s26
      // Predicated region
      $region73: #{tpu_custom_call.1} parent=5 // pred_check
        %p957 = pneg %p956
      $region74: #{tpu_custom_call.1} parent=5 // pred_check_branch
        %959 = sbr.rel (%p957) target = $region76
      $region75: #{tpu_custom_call.1} parent=5 // pred_region
        %s960 = ssub.s32 %s26, 2
        // Predicated region
        $region77: #{tpu_custom_call.1} parent=75 // pred_check
          %p961 = pneg %p180
        $region78: #{tpu_custom_call.1} parent=75 // pred_check_branch
          %963 = sbr.rel (%p961) target = $region80
        $region79: #{tpu_custom_call.1} parent=75 // pred_region
          %s964 = sand.u32 %s165, 1
          %s965 = scalar_lea.sflag [#allocation5], %s964
          %s966 = sand.u32 %s165, 1
          %s967 = smul.addr %s966, 8
          %s968 = scalar_lea.vmem [#allocation11], %s967
          %969 = dma.done %s965, 128
        $region80: #{tpu_custom_call.1} parent=75 // pred_fallthru
          _
        // Predicated region
        $region81: #{tpu_custom_call.1} parent=75 // pred_check
          %p970 = pneg %p206
        $region82: #{tpu_custom_call.1} parent=75 // pred_check_branch
          %972 = sbr.rel (%p970) target = $region84
        $region83: #{tpu_custom_call.1} parent=75 // pred_region
          %s973 = sand.u32 %s191, 1
          %s974 = scalar_lea.sflag [#allocation13], %s973
          %s975 = sand.u32 %s191, 1
          %s976 = smul.addr %s975, 8
          %s977 = scalar_lea.vmem [#allocation12], %s976
          %978 = dma.done %s974, 128
        $region84: #{tpu_custom_call.1} parent=75 // pred_fallthru
          _
      $region76: #{tpu_custom_call.1} parent=5 // pred_fallthru
        _
    $region6: #{tpu_custom_call.1} parent=1 // loop_footer
      %s30 = sadd.s32 1, %s26
    $region7: #{tpu_custom_call.1} parent=1 // loop_footer_branch
      %25 = sbr.rel target = $region3
    $region8: #{tpu_custom_call.1} parent=1 // loop_exit
      _
    %979 = vsyncpa [#allocation4], 1
    %s980 = scalar_lea.sflag [#allocation4], 1
    %981 = vsyncpa %s980, 1
    %982 = vsyncpa [#allocation7], 1
    %s983 = scalar_lea.sflag [#allocation7], 1
    %984 = vsyncpa %s983, 1
    %985 = vsyncpa [#allocation10], 1
    %s986 = scalar_lea.sflag [#allocation10], 1
    %987 = vsyncpa %s986, 1
    %988 = vsyncpa [#allocation5], 1
    %s989 = scalar_lea.sflag [#allocation5], 1
    %990 = vsyncpa %s989, 1
    %991 = vsyncpa [#allocation13], 1
    %s992 = scalar_lea.sflag [#allocation13], 1
    %993 = vsyncpa %s992, 1

</llo_original>
